<compile_context>
chip_gen: v6e
topology: v6e:2x2x1
jax: 0.10.0
libtpu: 0.0.40
codegen_flags: <defaults>
</compile_context>

<pallas_src>
import jax
import jax.numpy as jnp
from jax.experimental import pallas as pl
from jax.experimental.pallas import tpu as pltpu

_MIB = 1024 * 1024


def _round_up(v, m):
    return -(-v // m) * m


def _vmem_capacity_bytes():
    """Physical VMEM per TensorCore; conservative v7x fallback (64 MiB) if unqueryable."""
    try:
        return int(pltpu.get_tpu_info().vmem_capacity_bytes)
    except Exception:
        return 64 * _MIB


def _pick_block_rows(n_rows, per_row_bytes, budget_bytes, sublane_align=1):
    """Largest leading-axis block that fits `budget_bytes`; if the problem is big enough,
    shrink it so the 1-D grid has >= 4 (else >= 2) balanced steps (v7x megacore)."""
    def legalize(v):
        v = max(1, min(int(v), n_rows))
        if v == n_rows or sublane_align <= 1:
            return v
        v = (v // sublane_align) * sublane_align
        return v if v > 0 else min(sublane_align, n_rows)

    m = legalize(budget_bytes // max(per_row_bytes, 1))
    for steps in (4, 2):
        if n_rows >= steps and pl.cdiv(n_rows, m) < steps:
            cand = legalize(pl.cdiv(n_rows, steps))
            if pl.cdiv(n_rows, cand) >= steps:
                m = min(m, cand)
                break
    return m


# ---------------------------------------------------------------------------
# Path A: small spatial maps — one lane-dense selection matmul over flattened H*W.
# ---------------------------------------------------------------------------
def _reorg_flat_kernel(s_ref, x_ref, o_ref):
    # s_ref: (H*W, 4*Hh*Wh) 0/1 selection (a permutation matrix).
    # x_ref: (M, H*W) rows = flattened (b, c) slices.    o_ref: (M, 4*Hh*Wh).
    s = s_ref[...]
    x = x_ref[...]
    if x.dtype != s.dtype:
        x = x.astype(s.dtype)
    o_ref[...] = jnp.dot(x, s, preferred_element_type=jnp.float32).astype(o_ref.dtype)


def _reorg_small_map(x, compute_dtype, block_budget, vmem_cap):
    B, C, H, W = x.shape
    hh, wh = H // 2, W // 2
    n, hw = B * C, H * W
    isz = jnp.dtype(x.dtype).itemsize
    csz = jnp.dtype(compute_dtype).itemsize

    x2 = x.reshape(n, hw)  # contiguous -> free view

    # S[h*W + w, (2*h2 + w2)*Hh*Wh + i*Wh + j] = (h == 2*i + h2) & (w == 2*j + w2)
    p = jnp.arange(hw, dtype=jnp.int32)
    h_in, w_in = p // W, p % W
    q = jnp.arange(hw, dtype=jnp.int32)          # 4*Hh*Wh == H*W
    s_idx, rem = q // (hh * wh), q % (hh * wh)
    i_out, j_out = rem // wh, rem % wh
    h2, w2 = s_idx // 2, s_idx % 2
    s_mat = ((h_in[:, None] == 2 * i_out[None, :] + h2[None, :]) &
             (w_in[:, None] == 2 * j_out[None, :] + w2[None, :])).astype(compute_dtype)

    lane = _round_up(hw, 128)
    per_row = lane * (2 * isz + csz + 4)          # in row + out row + cast row + f32 acc row
    s_bytes = _round_up(hw, 8) * lane * csz
    m = _pick_block_rows(n, per_row, max(block_budget - s_bytes, per_row), sublane_align=8)
    grid = (pl.cdiv(n, m),)

    # Pallas double-buffers the in/out blocks; budget against 2x (+ S + headroom).
    need = 2 * m * per_row + 2 * s_bytes + 8 * _MIB
    vmem_limit = int(min(int(vmem_cap * 0.8), max(32 * _MIB, need)))

    cost = pl.CostEstimate(flops=2 * n * hw * hw, transcendentals=0,
                           bytes_accessed=2 * n * hw * isz + hw * hw * csz)

    out2 = pl.pallas_call(
        _reorg_flat_kernel,
        out_shape=jax.ShapeDtypeStruct((n, hw), x.dtype),
        grid=grid,
        in_specs=[pl.BlockSpec((hw, hw), lambda r: (0, 0)),     # S: constant index, reused
                  pl.BlockSpec((m, hw), lambda r: (r, 0))],
        out_specs=pl.BlockSpec((m, hw), lambda r: (r, 0)),
        compiler_params=pltpu.CompilerParams(
            dimension_semantics=("parallel",), vmem_limit_bytes=vmem_limit),
        cost_estimate=cost,
    )(s_mat, x2)
    # (B*C, H*W) -> (B, 4*C, Hh, Wh): contiguous, free reshape.
    return out2.reshape(B, 4 * C, hh, wh)


# ---------------------------------------------------------------------------
# Path B: large spatial maps — strided row selection + per-parity column compaction.
# ---------------------------------------------------------------------------
def _reorg_blocked_kernel(s_ref, x_ref, o_ref):
    # s_ref: (2, W, Wh) with s_ref[w2, k, j] = (k == 2*j + w2)
    # x_ref: (Ct, H, W)        o_ref: (Ct, 4, Hh, Wh); subchannel index s = 2*h2 + w2
    ct, h, w = x_ref.shape
    hh, wh = h // 2, w // 2
    s_mat = s_ref[...]                                   # loaded once, reused for both h2
    for h2 in range(2):
        # Sublane-strided load of rows 2*i + h2 -> (Ct, Hh, W); no row-selection matmul.
        rows = x_ref[:, pl.ds(h2, hh, stride=2), :]
        if rows.dtype != s_mat.dtype:
            rows = rows.astype(s_mat.dtype)
        rows2d = rows.reshape(ct * hh, w)                # free when Hh % 8 == 0 (typical here)
        for w2 in range(2):
            # One aligned MXU dot per (h2, w2); stored directly (no lane-unaligned slices).
            y = jnp.dot(rows2d, s_mat[w2], preferred_element_type=jnp.float32)
            o_ref[:, 2 * h2 + w2] = y.reshape(ct, hh, wh).astype(o_ref.dtype)


def _reorg_large_map(x, compute_dtype, block_budget, vmem_cap):
    B, C, H, W = x.shape
    hh, wh = H // 2, W // 2
    n = B * C
    isz = jnp.dtype(x.dtype).itemsize
    csz = jnp.dtype(compute_dtype).itemsize

    x3 = x.reshape(n, H, W)  # contiguous -> free view

    # Column-selection matrices, built once in the wrapper (not per grid step).
    k = jnp.arange(W, dtype=jnp.int32)[None, :, None]
    j = jnp.arange(wh, dtype=jnp.int32)[None, None, :]
    w2 = jnp.arange(2, dtype=jnp.int32)[:, None, None]
    s_mat = (k == 2 * j + w2).astype(compute_dtype)      # (2, W, Wh)

    # Per-channel VMEM footprint (tile-padded), incl. cast rows + f32 dot result.
    in_per_ch = _round_up(H, 8) * _round_up(W, 128) * isz
    out_per_ch = 4 * _round_up(hh, 8) * _round_up(wh, 128) * isz
    tmp_per_ch = (_round_up(hh, 8) * _round_up(W, 128) * csz
                  + _round_up(hh, 8) * _round_up(wh, 128) * 4)
    per_ch = in_per_ch + out_per_ch + tmp_per_ch
    s_bytes = 2 * _round_up(W, 8) * _round_up(wh, 128) * csz

    ct = _pick_block_rows(n, per_ch, max(block_budget - s_bytes, per_ch), sublane_align=1)
    grid = (pl.cdiv(n, ct),)

    need = 2 * ct * (in_per_ch + out_per_ch) + ct * tmp_per_ch + 2 * s_bytes + 8 * _MIB
    vmem_limit = int(min(int(vmem_cap * 0.8), max(32 * _MIB, need)))

    cost = pl.CostEstimate(flops=8 * n * hh * wh * W, transcendentals=0,
                           bytes_accessed=2 * n * H * W * isz + 2 * W * wh * csz)

    out4 = pl.pallas_call(
        _reorg_blocked_kernel,
        out_shape=jax.ShapeDtypeStruct((n, 4, hh, wh), x.dtype),
        grid=grid,
        in_specs=[pl.BlockSpec((2, W, wh), lambda r: (0, 0, 0)),  # S: constant index, reused
                  pl.BlockSpec((ct, H, W), lambda r: (r, 0, 0))],
        out_specs=pl.BlockSpec((ct, 4, hh, wh), lambda r: (r, 0, 0, 0)),
        compiler_params=pltpu.CompilerParams(
            dimension_semantics=("parallel",), vmem_limit_bytes=vmem_limit),
        cost_estimate=cost,
    )(s_mat, x3)
    # (B*C, 4, Hh, Wh) -> (B, 4*C, Hh, Wh): contiguous trailing dims, free reshape.
    return out4.reshape(B, 4 * C, hh, wh)


def reorg(x, *, small_map_elems=512):
    """Pallas TPU implementation of the PyTorch Reorg module (NCHW, block=2)."""
    B, C, H, W = x.shape
    assert H % 2 == 0 and W % 2 == 0, "Reorg requires even spatial dims"

    compute_dtype = x.dtype if jnp.issubdtype(x.dtype, jnp.floating) else jnp.float32

    vmem_cap = _vmem_capacity_bytes()
    big_vmem = vmem_cap >= 96 * _MIB                     # v5e/v6e (128 MiB) vs v7x (64 MiB)
    block_budget = (20 if big_vmem else 10) * _MIB       # single-buffered in+out+temp / block

    if H * W <= small_map_elems:
        return _reorg_small_map(x, compute_dtype, block_budget, vmem_cap)
    return _reorg_large_map(x, compute_dtype, block_budget, vmem_cap)


def reorg_reference(x):
    """Pure-JAX reference reproducing the exact PyTorch view/permute semantics."""
    B, C, H, W = x.shape
    y = x.reshape(B, C, H // 2, 2, W // 2, 2)
    y = jnp.transpose(y, (0, 1, 3, 5, 2, 4))
    return y.reshape(B, C * 4, H // 2, W // 2)


if __name__ == "__main__":
    # Small spatial map -> lane-dense flattened-spatial matmul path.
    x = jax.random.normal(jax.random.PRNGKey(0), (2, 4, 16, 16), dtype=jnp.float32)
    out = jax.block_until_ready(reorg(x))
    ref = reorg_reference(x)
    assert out.shape == ref.shape, (out.shape, ref.shape)
    assert out.dtype == ref.dtype, (out.dtype, ref.dtype)
    assert bool(jnp.all(out == ref)), "Pallas Reorg (small-map path) mismatch vs reference"

    # Larger spatial map -> blocked-channel strided-row / column-compaction path.
    x2 = jax.random.normal(jax.random.PRNGKey(0), (2, 3, 32, 32), dtype=jnp.float32)
    out2 = jax.block_until_ready(reorg(x2))
    ref2 = reorg_reference(x2)
    assert out2.shape == ref2.shape, (out2.shape, ref2.shape)
    assert bool(jnp.all(out2 == ref2)), "Pallas Reorg (blocked path) mismatch vs reference"

    print("KERNEL_OK")
</pallas_src>

<mosaic_0001>
module attributes {stable_mosaic.version = 11 : i64} {
  func.func @_reorg_flat_kernel(%arg0: i32, %arg1: memref<256x256xf32, #tpu.memory_space<vmem>>, %arg2: memref<8x256xf32, #tpu.memory_space<vmem>>, %arg3: memref<8x256xf32, #tpu.memory_space<vmem>>) attributes {dimension_semantics = [#tpu.dimension_semantics<parallel>], iteration_bounds = array<i64: 1>, scalar_prefetch = 0 : i64, scratch_operands = 0 : i64, tpu.core_type = #tpu.core_type<tc>, window_params = [{pipeline_mode = #tpu.pipeline_mode<synchronous>, transform_indices = @transform_0, window_bounds = array<i64: 256, 256>}, {transform_indices = @transform_1, window_bounds = array<i64: 8, 256>}, {transform_indices = @transform_2, window_bounds = array<i64: 8, 256>}]} {
    %c0 = arith.constant 0 : index
    %c0_0 = arith.constant 0 : index
    %0 = vector.load %arg1[%c0, %c0_0] : memref<256x256xf32, #tpu.memory_space<vmem>>, vector<256x256xf32>
    %c0_1 = arith.constant 0 : index
    %c0_2 = arith.constant 0 : index
    %1 = vector.load %arg2[%c0_1, %c0_2] : memref<8x256xf32, #tpu.memory_space<vmem>>, vector<8x256xf32>
    %cst = arith.constant dense<0.000000e+00> : vector<8x256xf32>
    %2 = tpu.matmul %1, %0, %cst {dimension_numbers = #tpu.dot_dimension_numbers<[1], [0], [0], [1], [0, 0, 1, 1], [], []>} : vector<8x256xf32>, vector<256x256xf32>, vector<8x256xf32> -> vector<8x256xf32>
    %c0_3 = arith.constant 0 : index
    %c0_4 = arith.constant 0 : index
    %3 = vector.load %arg3[%c0_3, %c0_4] : memref<8x256xf32, #tpu.memory_space<vmem>>, vector<8x256xf32>
    tpu.vector_store %arg3[%c0_3, %c0_4], %2 {strides = array<i32>} : memref<8x256xf32, #tpu.memory_space<vmem>>, vector<8x256xf32>,
    return
  }
  func.func @transform_0(%arg0: i32) -> (i32, i32) {
    %c0_i32 = arith.constant 0 : i32
    %c0_i32_0 = arith.constant 0 : i32
    %c0_i32_1 = arith.constant 0 : i32
    return %c0_i32, %c0_i32_0 : i32, i32
  }
  func.func @transform_1(%arg0: i32) -> (i32, i32) {
    %c0_i32 = arith.constant 0 : i32
    %c0_i32_0 = arith.constant 0 : i32
    return %arg0, %c0_i32 : i32, i32
  }
  func.func @transform_2(%arg0: i32) -> (i32, i32) {
    %c0_i32 = arith.constant 0 : i32
    %c0_i32_0 = arith.constant 0 : i32
    return %arg0, %c0_i32 : i32, i32
  }
}

</mosaic_0001>

<llo_original>
// kernel: tpu_custom_call.1
$region0: #{tpu_custom_call.1}
  #allocation0 [shape = 'u32[]', space=smem, size = 0x4, offset = 0x4, fixed_abs, tag = 'smem constant byte address 0x4 - core index']
  #allocation1 [shape = 'u32[144,128]{1,0:T(1,128)}', space=vmem, size = 0x12000, scoped, tag = 'internal scratch']
  %s0 = inlined_call_operand.hbm [shape: f32[256,256], index: 0, kind: input, shape index: {}]
  %s1 = inlined_call_operand.hbm [shape: f32[8,256], index: 1, kind: input, shape index: {}]
  %s2 = inlined_call_operand.hbm [shape: f32[8,256], index: 2, kind: output, shape index: {}]
  %s3 = sld [smem:[#allocation0]]
  $region26: #{tpu_custom_call.1} parent=0
    _
  %s5 = ssub.s32 1, %s3
  %s6 = scalar_select 0, %s5, %s3
  $region1: #{tpu_custom_call.1} parent=0
    #allocation2 [shape = 'u8[262144]{0}', space=vmem, size = 0x40000, scoped, tag = 'input window, operand 0, single buffered']
    #allocation3 [shape = 's32[1]{0}', space=sflag, size = 0x4, scoped, tag = 'scoped memory for tpu_custom_call.1']
    #allocation4 [shape = 's32[1]{0}', space=sflag, size = 0x4, scoped, tag = 'scoped memory for tpu_custom_call.1']
    #allocation5 [shape = 'u8[8192]{0}', space=vmem, size = 0x2000, scoped, tag = 'input window, operand 1, single buffered']
    #allocation6 [shape = 's32[1]{0}', space=sflag, size = 0x4, scoped, tag = 'scoped memory for tpu_custom_call.1']
    #allocation7 [shape = 'u8[8192]{0}', space=vmem, size = 0x2000, scoped, tag = 'output window, operand 0, single buffered']
    %7 = vsyncpa [#allocation3], 0
    %8 = vsyncpa [#allocation6], 0
    %9 = vsyncpa [#allocation4], 0
    // Predicated region
    $region2: #{tpu_custom_call.1} parent=1 // pred_check
      _
    $region3: #{tpu_custom_call.1} parent=1 // pred_check_branch
      %11 = sbr.rel (0) target = $region5
    $region4: #{tpu_custom_call.1} parent=1 // pred_region
      %s13 = ssub.s32 8192, 8192
      %14 = vsyncadd [#allocation3], %s13
      %s15 = sshll.u32 [#allocation2], 4
      %s16 = int_to_ptr.vmem [resolvable:$true] %s15
      %21 = dma.hbm_to_vmem [thread:$0]  %s0, 8192, %s16, [#allocation3], 256, 256, 16
    $region5: #{tpu_custom_call.1} parent=1 // pred_fallthru
      _
    // Predicated region
    $region6: #{tpu_custom_call.1} parent=1 // pred_check
      _
    $region7: #{tpu_custom_call.1} parent=1 // pred_check_branch
      %23 = sbr.rel (0) target = $region9
    $region8: #{tpu_custom_call.1} parent=1 // pred_region
      %s25 = ssub.s32 256, 256
      %26 = vsyncadd [#allocation6], %s25
      %s28 = sshll.u32 [#allocation5], 4
      %s29 = int_to_ptr.vmem [resolvable:$true] %s28
      %31 = dma.hbm_to_vmem [thread:$0]  %s1, 256, %s29, [#allocation6]
    $region9: #{tpu_custom_call.1} parent=1 // pred_fallthru
      _
    // Predicated region
    $region10: #{tpu_custom_call.1} parent=1 // pred_check
      _
    $region11: #{tpu_custom_call.1} parent=1 // pred_check_branch
      %33 = sbr.rel (0) target = $region13
    $region12: #{tpu_custom_call.1} parent=1 // pred_region
      %34 = dma.done [#allocation3], 8192
    $region13: #{tpu_custom_call.1} parent=1 // pred_fallthru
      _
    // Predicated region
    $region14: #{tpu_custom_call.1} parent=1 // pred_check
      _
    $region15: #{tpu_custom_call.1} parent=1 // pred_check_branch
      %36 = sbr.rel (0) target = $region17
    $region16: #{tpu_custom_call.1} parent=1 // pred_region
      %37 = dma.done [#allocation6], 256
    $region17: #{tpu_custom_call.1} parent=1 // pred_fallthru
      _
    %v38 = vld [vmem:[#allocation2] sm:$0xff]
    %v39 = vld [vmem:[#allocation2 + $0x8] sm:$0xff]
    %v40 = vld [vmem:[#allocation2 + $0x10] sm:$0xff]
    %v41 = vld [vmem:[#allocation2 + $0x18] sm:$0xff]
    %v42 = vld [vmem:[#allocation2 + $0x20] sm:$0xff]
    %v43 = vld [vmem:[#allocation2 + $0x28] sm:$0xff]
    %v44 = vld [vmem:[#allocation2 + $0x30] sm:$0xff]
    %v45 = vld [vmem:[#allocation2 + $0x38] sm:$0xff]
    %v46 = vld [vmem:[#allocation2 + $0x40] sm:$0xff]
    %v47 = vld [vmem:[#allocation2 + $0x48] sm:$0xff]
    %v48 = vld [vmem:[#allocation2 + $0x50] sm:$0xff]
    %v49 = vld [vmem:[#allocation2 + $0x58] sm:$0xff]
    %v50 = vld [vmem:[#allocation2 + $0x60] sm:$0xff]
    %v51 = vld [vmem:[#allocation2 + $0x68] sm:$0xff]
    %v52 = vld [vmem:[#allocation2 + $0x70] sm:$0xff]
    %v53 = vld [vmem:[#allocation2 + $0x78] sm:$0xff]
    %v54 = vld [vmem:[#allocation2 + $0x80] sm:$0xff]
    %v55 = vld [vmem:[#allocation2 + $0x88] sm:$0xff]
    %v56 = vld [vmem:[#allocation2 + $0x90] sm:$0xff]
    %v57 = vld [vmem:[#allocation2 + $0x98] sm:$0xff]
    %v58 = vld [vmem:[#allocation2 + $0xa0] sm:$0xff]
    %v59 = vld [vmem:[#allocation2 + $0xa8] sm:$0xff]
    %v60 = vld [vmem:[#allocation2 + $0xb0] sm:$0xff]
    %v61 = vld [vmem:[#allocation2 + $0xb8] sm:$0xff]
    %v62 = vld [vmem:[#allocation2 + $0xc0] sm:$0xff]
    %v63 = vld [vmem:[#allocation2 + $0xc8] sm:$0xff]
    %v64 = vld [vmem:[#allocation2 + $0xd0] sm:$0xff]
    %v65 = vld [vmem:[#allocation2 + $0xd8] sm:$0xff]
    %v66 = vld [vmem:[#allocation2 + $0xe0] sm:$0xff]
    %v67 = vld [vmem:[#allocation2 + $0xe8] sm:$0xff]
    %v68 = vld [vmem:[#allocation2 + $0xf0] sm:$0xff]
    %v69 = vld [vmem:[#allocation2 + $0xf8] sm:$0xff]
    %v70 = vld [vmem:[#allocation2 + $0x100] sm:$0xff]
    %v71 = vld [vmem:[#allocation2 + $0x108] sm:$0xff]
    %v72 = vld [vmem:[#allocation2 + $0x110] sm:$0xff]
    %v73 = vld [vmem:[#allocation2 + $0x118] sm:$0xff]
    %v74 = vld [vmem:[#allocation2 + $0x120] sm:$0xff]
    %v75 = vld [vmem:[#allocation2 + $0x128] sm:$0xff]
    %v76 = vld [vmem:[#allocation2 + $0x130] sm:$0xff]
    %v77 = vld [vmem:[#allocation2 + $0x138] sm:$0xff]
    %v78 = vld [vmem:[#allocation2 + $0x140] sm:$0xff]
    %v79 = vld [vmem:[#allocation2 + $0x148] sm:$0xff]
    %v80 = vld [vmem:[#allocation2 + $0x150] sm:$0xff]
    %v81 = vld [vmem:[#allocation2 + $0x158] sm:$0xff]
    %v82 = vld [vmem:[#allocation2 + $0x160] sm:$0xff]
    %v83 = vld [vmem:[#allocation2 + $0x168] sm:$0xff]
    %v84 = vld [vmem:[#allocation2 + $0x170] sm:$0xff]
    %v85 = vld [vmem:[#allocation2 + $0x178] sm:$0xff]
    %v86 = vld [vmem:[#allocation2 + $0x180] sm:$0xff]
    %v87 = vld [vmem:[#allocation2 + $0x188] sm:$0xff]
    %v88 = vld [vmem:[#allocation2 + $0x190] sm:$0xff]
    %v89 = vld [vmem:[#allocation2 + $0x198] sm:$0xff]
    %v90 = vld [vmem:[#allocation2 + $0x1a0] sm:$0xff]
    %v91 = vld [vmem:[#allocation2 + $0x1a8] sm:$0xff]
    %v92 = vld [vmem:[#allocation2 + $0x1b0] sm:$0xff]
    %v93 = vld [vmem:[#allocation2 + $0x1b8] sm:$0xff]
    %v94 = vld [vmem:[#allocation2 + $0x1c0] sm:$0xff]
    %v95 = vld [vmem:[#allocation2 + $0x1c8] sm:$0xff]
    %v96 = vld [vmem:[#allocation2 + $0x1d0] sm:$0xff]
    %v97 = vld [vmem:[#allocation2 + $0x1d8] sm:$0xff]
    %v98 = vld [vmem:[#allocation2 + $0x1e0] sm:$0xff]
    %v99 = vld [vmem:[#allocation2 + $0x1e8] sm:$0xff]
    %v100 = vld [vmem:[#allocation2 + $0x1f0] sm:$0xff]
    %v101 = vld [vmem:[#allocation2 + $0x1f8] sm:$0xff]
    %v102 = vld [vmem:[#allocation5] sm:$0xff]
    %v103 = vld [vmem:[#allocation5 + $0x8] sm:$0xff]
    %104 = vmatprep.subr.mxu0 %v69
    %105 = vmatpush1.msra.mxu0 %v68
    %106 = vmatprep.subr.mxu0 %v67
    %107 = vmatpush1.msra.mxu0 %v66
    %108 = vmatprep.subr.mxu0 %v65
    %109 = vmatpush1.msra.mxu0 %v64
    %110 = vmatprep.subr.mxu0 %v63
    %111 = vmatpush1.msra.mxu0 %v62
    %112 = vmatprep.subr.mxu0 %v61
    %113 = vmatpush1.msra.mxu0 %v60
    %114 = vmatprep.subr.mxu0 %v59
    %115 = vmatpush1.msra.mxu0 %v58
    %116 = vmatprep.subr.mxu0 %v57
    %117 = vmatpush1.msra.mxu0 %v56
    %118 = vmatprep.subr.mxu0 %v55
    %119 = vmatpush1.msra.mxu0 %v54
    %120 = vmatprep.subr.mxu0 %v53
    %121 = vmatpush1.msra.mxu0 %v52
    %122 = vmatprep.subr.mxu0 %v51
    %123 = vmatpush1.msra.mxu0 %v50
    %124 = vmatprep.subr.mxu0 %v49
    %125 = vmatpush1.msra.mxu0 %v48
    %126 = vmatprep.subr.mxu0 %v47
    %127 = vmatpush1.msra.mxu0 %v46
    %128 = vmatprep.subr.mxu0 %v45
    %129 = vmatpush1.msra.mxu0 %v44
    %130 = vmatprep.subr.mxu0 %v43
    %131 = vmatpush1.msra.mxu0 %v42
    %132 = vmatprep.subr.mxu0 %v41
    %133 = vmatpush1.msra.mxu0 %v40
    %134 = vmatprep.subr.mxu0 %v39
    %135 = vmatpush1.msra.mxu0 %v38
    %136 = vmatprep.subr.mxu0 %v101
    %137 = vmatpush2.msra.mxu0 %v100
    %138 = vmatprep.subr.mxu0 %v99
    %139 = vmatpush2.msra.mxu0 %v98
    %140 = vmatprep.subr.mxu0 %v97
    %141 = vmatpush2.msra.mxu0 %v96
    %142 = vmatprep.subr.mxu0 %v95
    %143 = vmatpush2.msra.mxu0 %v94
    %144 = vmatprep.subr.mxu0 %v93
    %145 = vmatpush2.msra.mxu0 %v92
    %146 = vmatprep.subr.mxu0 %v91
    %147 = vmatpush2.msra.mxu0 %v90
    %148 = vmatprep.subr.mxu0 %v89
    %149 = vmatpush2.msra.mxu0 %v88
    %150 = vmatprep.subr.mxu0 %v87
    %151 = vmatpush2.msra.mxu0 %v86
    %152 = vmatprep.subr.mxu0 %v85
    %153 = vmatpush2.msra.mxu0 %v84
    %154 = vmatprep.subr.mxu0 %v83
    %155 = vmatpush2.msra.mxu0 %v82
    %156 = vmatprep.subr.mxu0 %v81
    %157 = vmatpush2.msra.mxu0 %v80
    %158 = vmatprep.subr.mxu0 %v79
    %159 = vmatpush2.msra.mxu0 %v78
    %160 = vmatprep.subr.mxu0 %v77
    %161 = vmatpush2.msra.mxu0 %v76
    %162 = vmatprep.subr.mxu0 %v75
    %163 = vmatpush2.msra.mxu0 %v74
    %164 = vmatprep.subr.mxu0 %v73
    %165 = vmatpush2.msra.mxu0 %v72
    %166 = vmatprep.subr.mxu0 %v71
    %167 = vmatpush2.msra.mxu0 %v70
    %168 = vmatprep.mubr.f32.mxu0 %v103
    %169 = vmatmul.mubr.f32.gmra.mxu0 %v102
    %v170 = vpop.f32.mrf.mxu0
    %v171 = vadd.f32 0.0, %v170
    %v172 = vpop.f32.mrf.mxu0
    %v173 = vadd.f32 0.0, %v172
    %174 = vdwg.mxu0
    %175 = vst [vmem:[#allocation7] sm:$0xff] %v171
    %176 = vst [vmem:[#allocation7 + $0x8] sm:$0xff] %v173
    // Predicated region
    $region18: #{tpu_custom_call.1} parent=1 // pred_check
      _
    $region19: #{tpu_custom_call.1} parent=1 // pred_check_branch
      %178 = sbr.rel (0) target = $region21
    $region20: #{tpu_custom_call.1} parent=1 // pred_region
      %s180 = ssub.s32 256, 256
      %181 = vsyncadd [#allocation4], %s180
      %s183 = sshll.u32 [#allocation7], 4
      %s184 = int_to_ptr.vmem [resolvable:$true] %s183
      %186 = dma.vmem_to_hbm [thread:$0]  %s184, 256, %s2, [#allocation4]
    $region21: #{tpu_custom_call.1} parent=1 // pred_fallthru
      _
    // Predicated region
    $region22: #{tpu_custom_call.1} parent=1 // pred_check
      _
    $region23: #{tpu_custom_call.1} parent=1 // pred_check_branch
      %188 = sbr.rel (0) target = $region25
    $region24: #{tpu_custom_call.1} parent=1 // pred_region
      %189 = dma.done [#allocation4], 256
    $region25: #{tpu_custom_call.1} parent=1 // pred_fallthru
      _
    %190 = vsyncpa [#allocation3], 1
    %191 = vsyncpa [#allocation6], 1
    %192 = vsyncpa [#allocation4], 1

</llo_original>
